<compile_context>
chip_gen: v7x
topology: tpu7x:2x2x1
jax: 0.10.0
libtpu: 0.0.40
codegen_flags: <defaults>
</compile_context>

<pallas_src>
import jax
import jax.numpy as jnp
from jax.experimental import pallas as pl
from jax.experimental.pallas import tpu as pltpu

ENV_SIZE = 16
D_IN = ENV_SIZE * ENV_SIZE      # 256
H1 = 256
H2 = 128
N_ACTIONS = 4                   # len(config.Actions)
N_OUT_PAD = 128                 # lane-dense padded logits width


def _round_up(x, m):
    return ((x + m - 1) // m) * m


def _mlp_kernel(x_ref, w1_ref, b1_ref, w2_ref, b2_ref, w3_ref, b3_ref, o_ref):
    # linear1 + ReLU (bf16 matmul, f32 accumulate / bias / ReLU)
    h1 = jnp.dot(x_ref[...], w1_ref[...], preferred_element_type=jnp.float32)
    h1 = jnp.maximum(h1 + b1_ref[...], 0.0)
    # linear2 + ReLU
    h2 = jnp.dot(h1.astype(jnp.bfloat16), w2_ref[...],
                 preferred_element_type=jnp.float32)
    h2 = jnp.maximum(h2 + b2_ref[...], 0.0)
    # linear3 (logits, padded to 128 lanes, no activation)
    out = jnp.dot(h2.astype(jnp.bfloat16), w3_ref[...],
                  preferred_element_type=jnp.float32)
    o_ref[...] = (out + b3_ref[...]).astype(o_ref.dtype)


def behavioral_cloning_forward(x, params, *, tb=512):
    """x: (B, ENV_SIZE, ENV_SIZE) or (B, C, H, W) with prod(non-batch) == D_IN."""
    b = x.shape[0]
    x2d = x.reshape(b, -1).astype(jnp.float32)
    assert x2d.shape[1] == D_IN

    w1, b1, w2, b2, w3, b3 = params

    # Zero-pad the 4-wide logits layer to a lane-dense 128 columns.
    w3p = jnp.zeros((H2, N_OUT_PAD), jnp.float32).at[:, :N_ACTIONS].set(w3)
    b3p = jnp.zeros((N_OUT_PAD,), jnp.float32).at[:N_ACTIONS].set(b3)

    # bf16 matmul operands; biases stay f32 (added to the f32 accumulator).
    x_bf = x2d.astype(jnp.bfloat16)
    w1b = w1.astype(jnp.bfloat16)
    w2b = w2.astype(jnp.bfloat16)
    w3b = w3p.astype(jnp.bfloat16)
    b1r = b1.reshape(1, H1).astype(jnp.float32)
    b2r = b2.reshape(1, H2).astype(jnp.float32)
    b3r = b3p.reshape(1, N_OUT_PAD).astype(jnp.float32)

    # Batch tiling: TB rows per grid step, TB a multiple of 8; pad B up to a
    # multiple of TB so every block is full-size and (8,128)-aligned.
    tb = min(tb, max(8, _round_up(b, 8)))
    pb = _round_up(b, tb)
    if pb != b:
        x_bf = jnp.pad(x_bf, ((0, pb - b), (0, 0)))
    grid = (pb // tb,)

    def weight_spec(shape):
        return pl.BlockSpec(shape, lambda i: (0, 0))   # resident across grid

    out = pl.pallas_call(
        _mlp_kernel,
        out_shape=jax.ShapeDtypeStruct((pb, N_OUT_PAD), jnp.float32),
        grid=grid,
        in_specs=[
            pl.BlockSpec((tb, D_IN), lambda i: (i, 0)),      # x tile
            weight_spec((D_IN, H1)), weight_spec((1, H1)),
            weight_spec((H1, H2)), weight_spec((1, H2)),
            weight_spec((H2, N_OUT_PAD)), weight_spec((1, N_OUT_PAD)),
        ],
        out_specs=pl.BlockSpec((tb, N_OUT_PAD), lambda i: (i, 0)),
        compiler_params=pltpu.CompilerParams(
            dimension_semantics=("parallel",),
        ),
        cost_estimate=pl.CostEstimate(
            flops=2 * pb * (D_IN * H1 + H1 * H2 + H2 * N_OUT_PAD),
            transcendentals=0,
            bytes_accessed=(pb * D_IN * 2                       # x (bf16)
                            + pb * N_OUT_PAD * 4                # logits (f32)
                            + (D_IN * H1 + H1 * H2 + H2 * N_OUT_PAD) * 2
                            + (H1 + H2 + N_OUT_PAD) * 4),
        ),
    )(x_bf, w1b, b1r, w2b, b2r, w3b, b3r)

    # Strip batch padding and the padded logit columns.
    return out[:b, :N_ACTIONS]


def init_params(key):
    """Deterministic init mimicking PyTorch Linear default (U[-1/sqrt(fan_in), +])."""
    ks = jax.random.split(key, 6)

    def linear(kw, kb, fan_in, fan_out):
        bound = 1.0 / jnp.sqrt(jnp.float32(fan_in))
        # Stored as (in, out) -> kernel computes x @ W + b.
        w = jax.random.uniform(kw, (fan_in, fan_out), jnp.float32, -bound, bound)
        b = jax.random.uniform(kb, (fan_out,), jnp.float32, -bound, bound)
        return w, b

    w1, b1 = linear(ks[0], ks[1], D_IN, H1)
    w2, b2 = linear(ks[2], ks[3], H1, H2)
    w3, b3 = linear(ks[4], ks[5], H2, N_ACTIONS)
    return (w1, b1, w2, b2, w3, b3)


def reference_forward(x, params):
    w1, b1, w2, b2, w3, b3 = params
    h = x.reshape(x.shape[0], -1).astype(jnp.float32)
    h = jnp.maximum(h @ w1 + b1, 0.0)
    h = jnp.maximum(h @ w2 + b2, 0.0)
    return h @ w3 + b3


if __name__ == "__main__":
    key = jax.random.PRNGKey(0)
    k_param, k_x = jax.random.split(key)

    params = init_params(k_param)
    # Small example input: batch=2, spatial ENV_SIZE x ENV_SIZE.
    x = jax.random.normal(k_x, (2, ENV_SIZE, ENV_SIZE), jnp.float32)

    out = behavioral_cloning_forward(x, params)
    out = jax.block_until_ready(out)

    ref = reference_forward(x, params)
    assert out.shape == (2, N_ACTIONS)
    # bf16 matmul operands -> loose-but-safe tolerance vs the f32 reference.
    assert jnp.allclose(out, ref, atol=5e-2, rtol=5e-2), "mismatch vs reference"

    print("KERNEL_OK")
</pallas_src>

<mosaic_0001>
module attributes {stable_mosaic.version = 11 : i64} {
  func.func @_mlp_kernel(%arg0: i32, %arg1: memref<8x256xbf16, #tpu.memory_space<vmem>>, %arg2: memref<256x256xbf16, #tpu.memory_space<vmem>>, %arg3: memref<1x256xf32, #tpu.memory_space<vmem>>, %arg4: memref<256x128xbf16, #tpu.memory_space<vmem>>, %arg5: memref<1x128xf32, #tpu.memory_space<vmem>>, %arg6: memref<128x128xbf16, #tpu.memory_space<vmem>>, %arg7: memref<1x128xf32, #tpu.memory_space<vmem>>, %arg8: memref<8x128xf32, #tpu.memory_space<vmem>>) attributes {dimension_semantics = [#tpu.dimension_semantics<parallel>], iteration_bounds = array<i64: 1>, scalar_prefetch = 0 : i64, scratch_operands = 0 : i64, tpu.core_type = #tpu.core_type<tc>, window_params = [{transform_indices = @transform_0, window_bounds = array<i64: 8, 256>}, {pipeline_mode = #tpu.pipeline_mode<synchronous>, transform_indices = @transform_1, window_bounds = array<i64: 256, 256>}, {pipeline_mode = #tpu.pipeline_mode<synchronous>, transform_indices = @transform_2, window_bounds = array<i64: 1, 256>}, {pipeline_mode = #tpu.pipeline_mode<synchronous>, transform_indices = @transform_3, window_bounds = array<i64: 256, 128>}, {pipeline_mode = #tpu.pipeline_mode<synchronous>, transform_indices = @transform_4, window_bounds = array<i64: 1, 128>}, {pipeline_mode = #tpu.pipeline_mode<synchronous>, transform_indices = @transform_5, window_bounds = array<i64: 128, 128>}, {pipeline_mode = #tpu.pipeline_mode<synchronous>, transform_indices = @transform_6, window_bounds = array<i64: 1, 128>}, {transform_indices = @transform_7, window_bounds = array<i64: 8, 128>}]} {
    %c0 = arith.constant 0 : index
    %c0_0 = arith.constant 0 : index
    %0 = vector.load %arg1[%c0, %c0_0] : memref<8x256xbf16, #tpu.memory_space<vmem>>, vector<8x256xbf16>
    %c0_1 = arith.constant 0 : index
    %c0_2 = arith.constant 0 : index
    %1 = vector.load %arg2[%c0_1, %c0_2] : memref<256x256xbf16, #tpu.memory_space<vmem>>, vector<256x256xbf16>
    %cst = arith.constant dense<0.000000e+00> : vector<8x256xf32>
    %2 = tpu.matmul %0, %1, %cst {dimension_numbers = #tpu.dot_dimension_numbers<[1], [0], [0], [1], [0, 0, 1, 1], [], []>} : vector<8x256xbf16>, vector<256x256xbf16>, vector<8x256xf32> -> vector<8x256xf32>
    %c0_3 = arith.constant 0 : index
    %c0_4 = arith.constant 0 : index
    %3 = vector.load %arg3[%c0_3, %c0_4] : memref<1x256xf32, #tpu.memory_space<vmem>>, vector<1x256xf32>
    %4 = vector.broadcast %3 : vector<1x256xf32> to vector<8x256xf32>
    %5 = arith.addf %2, %4 : vector<8x256xf32>
    %cst_5 = arith.constant 0.000000e+00 : f32
    %6 = vector.broadcast %cst_5 : f32 to vector<8x256xf32>
    %7 = arith.maximumf %5, %6 : vector<8x256xf32>
    %8 = arith.truncf %7 : vector<8x256xf32> to vector<8x256xbf16>
    %c0_6 = arith.constant 0 : index
    %c0_7 = arith.constant 0 : index
    %9 = vector.load %arg4[%c0_6, %c0_7] : memref<256x128xbf16, #tpu.memory_space<vmem>>, vector<256x128xbf16>
    %cst_8 = arith.constant dense<0.000000e+00> : vector<8x128xf32>
    %10 = tpu.matmul %8, %9, %cst_8 {dimension_numbers = #tpu.dot_dimension_numbers<[1], [0], [0], [1], [0, 0, 1, 1], [], []>} : vector<8x256xbf16>, vector<256x128xbf16>, vector<8x128xf32> -> vector<8x128xf32>
    %c0_9 = arith.constant 0 : index
    %c0_10 = arith.constant 0 : index
    %11 = vector.load %arg5[%c0_9, %c0_10] : memref<1x128xf32, #tpu.memory_space<vmem>>, vector<1x128xf32>
    %12 = vector.broadcast %11 : vector<1x128xf32> to vector<8x128xf32>
    %13 = arith.addf %10, %12 : vector<8x128xf32>
    %cst_11 = arith.constant 0.000000e+00 : f32
    %14 = vector.broadcast %cst_11 : f32 to vector<8x128xf32>
    %15 = arith.maximumf %13, %14 : vector<8x128xf32>
    %16 = arith.truncf %15 : vector<8x128xf32> to vector<8x128xbf16>
    %c0_12 = arith.constant 0 : index
    %c0_13 = arith.constant 0 : index
    %17 = vector.load %arg6[%c0_12, %c0_13] : memref<128x128xbf16, #tpu.memory_space<vmem>>, vector<128x128xbf16>
    %cst_14 = arith.constant dense<0.000000e+00> : vector<8x128xf32>
    %18 = tpu.matmul %16, %17, %cst_14 {dimension_numbers = #tpu.dot_dimension_numbers<[1], [0], [0], [1], [0, 0, 1, 1], [], []>} : vector<8x128xbf16>, vector<128x128xbf16>, vector<8x128xf32> -> vector<8x128xf32>
    %c0_15 = arith.constant 0 : index
    %c0_16 = arith.constant 0 : index
    %19 = vector.load %arg7[%c0_15, %c0_16] : memref<1x128xf32, #tpu.memory_space<vmem>>, vector<1x128xf32>
    %20 = vector.broadcast %19 : vector<1x128xf32> to vector<8x128xf32>
    %21 = arith.addf %18, %20 : vector<8x128xf32>
    %c0_17 = arith.constant 0 : index
    %c0_18 = arith.constant 0 : index
    %22 = vector.load %arg8[%c0_17, %c0_18] : memref<8x128xf32, #tpu.memory_space<vmem>>, vector<8x128xf32>
    tpu.vector_store %arg8[%c0_17, %c0_18], %21 {strides = array<i32>} : memref<8x128xf32, #tpu.memory_space<vmem>>, vector<8x128xf32>,
    return
  }
  func.func @transform_0(%arg0: i32) -> (i32, i32) {
    %c0_i32 = arith.constant 0 : i32
    %c0_i32_0 = arith.constant 0 : i32
    return %arg0, %c0_i32 : i32, i32
  }
  func.func @transform_1(%arg0: i32) -> (i32, i32) {
    %c0_i32 = arith.constant 0 : i32
    %c0_i32_0 = arith.constant 0 : i32
    %c0_i32_1 = arith.constant 0 : i32
    return %c0_i32, %c0_i32_0 : i32, i32
  }
  func.func @transform_2(%arg0: i32) -> (i32, i32) {
    %c0_i32 = arith.constant 0 : i32
    %c0_i32_0 = arith.constant 0 : i32
    %c0_i32_1 = arith.constant 0 : i32
    return %c0_i32, %c0_i32_0 : i32, i32
  }
  func.func @transform_3(%arg0: i32) -> (i32, i32) {
    %c0_i32 = arith.constant 0 : i32
    %c0_i32_0 = arith.constant 0 : i32
    %c0_i32_1 = arith.constant 0 : i32
    return %c0_i32, %c0_i32_0 : i32, i32
  }
  func.func @transform_4(%arg0: i32) -> (i32, i32) {
    %c0_i32 = arith.constant 0 : i32
    %c0_i32_0 = arith.constant 0 : i32
    %c0_i32_1 = arith.constant 0 : i32
    return %c0_i32, %c0_i32_0 : i32, i32
  }
  func.func @transform_5(%arg0: i32) -> (i32, i32) {
    %c0_i32 = arith.constant 0 : i32
    %c0_i32_0 = arith.constant 0 : i32
    %c0_i32_1 = arith.constant 0 : i32
    return %c0_i32, %c0_i32_0 : i32, i32
  }
  func.func @transform_6(%arg0: i32) -> (i32, i32) {
    %c0_i32 = arith.constant 0 : i32
    %c0_i32_0 = arith.constant 0 : i32
    %c0_i32_1 = arith.constant 0 : i32
    return %c0_i32, %c0_i32_0 : i32, i32
  }
  func.func @transform_7(%arg0: i32) -> (i32, i32) {
    %c0_i32 = arith.constant 0 : i32
    %c0_i32_0 = arith.constant 0 : i32
    return %arg0, %c0_i32 : i32, i32
  }
}

</mosaic_0001>

<llo_original>
// kernel: tpu_custom_call.1
$region0: #{tpu_custom_call.1}
  #allocation0 [shape = 'u32[]', space=smem, size = 0x4, offset = 0x4, fixed_abs, tag = 'smem constant byte address 0x4 - core index']
  #allocation1 [shape = 'u32[144,128]{1,0:T(1,128)}', space=vmem, size = 0x12000, scoped, tag = 'internal scratch']
  %s0 = inlined_call_operand.hbm [shape: bf16[8,256], index: 0, kind: input, shape index: {}]
  %s1 = inlined_call_operand.hbm [shape: bf16[256,256], index: 1, kind: input, shape index: {}]
  %s2 = inlined_call_operand.vmem [shape: f32[1,256], index: 2, kind: input, shape index: {}]
  %s3 = inlined_call_operand.hbm [shape: bf16[256,128], index: 3, kind: input, shape index: {}]
  %s4 = inlined_call_operand.vmem [shape: f32[1,128], index: 4, kind: input, shape index: {}]
  %s5 = inlined_call_operand.hbm [shape: bf16[128,128], index: 5, kind: input, shape index: {}]
  %s6 = inlined_call_operand.vmem [shape: f32[1,128], index: 6, kind: input, shape index: {}]
  %s7 = inlined_call_operand.hbm [shape: f32[8,128], index: 7, kind: output, shape index: {}]
  %s8 = sld [smem:[#allocation0]]
  $region54: #{tpu_custom_call.1} parent=0
    _
  %s10 = ssub.s32 1, %s8
  %s11 = scalar_select 0, %s10, %s8
  $region1: #{tpu_custom_call.1} parent=0
    #allocation2 [shape = 'u8[4096]{0}', space=vmem, size = 0x1000, scoped, tag = 'input window, operand 0, single buffered']
    #allocation3 [shape = 's32[1]{0}', space=sflag, size = 0x4, scoped, tag = 'scoped memory for tpu_custom_call.1']
    #allocation4 [shape = 's32[1]{0}', space=sflag, size = 0x4, scoped, tag = 'scoped memory for tpu_custom_call.1']
    #allocation5 [shape = 'u8[131072]{0}', space=vmem, size = 0x20000, scoped, tag = 'input window, operand 1, single buffered']
    #allocation6 [shape = 's32[1]{0}', space=sflag, size = 0x4, scoped, tag = 'scoped memory for tpu_custom_call.1']
    #allocation7 [shape = 'u8[65536]{0}', space=vmem, size = 0x10000, scoped, tag = 'input window, operand 3, single buffered']
    #allocation8 [shape = 'u8[32768]{0}', space=vmem, size = 0x8000, scoped, tag = 'input window, operand 5, single buffered']
    #allocation9 [shape = 's32[1]{0}', space=sflag, size = 0x4, scoped, tag = 'scoped memory for tpu_custom_call.1']
    #allocation10 [shape = 'u8[4096]{0}', space=vmem, size = 0x1000, scoped, tag = 'output window, operand 0, single buffered']
    %12 = vsyncpa [#allocation3], 0
    %13 = vsyncpa [#allocation6], 0
    %14 = vsyncpa [#allocation9], 0
    %15 = vsyncpa [#allocation4], 0
    // Predicated region
    $region2: #{tpu_custom_call.1} parent=1 // pred_check
      _
    $region3: #{tpu_custom_call.1} parent=1 // pred_check_branch
      %17 = sbr.rel (0) target = $region5
    $region4: #{tpu_custom_call.1} parent=1 // pred_region
      %s19 = ssub.s32 128, 128
      %20 = vsyncadd [#allocation3], %s19
      %s22 = sshll.u32 [#allocation2], 4
      %s23 = int_to_ptr.vmem [resolvable:$true] %s22
      %25 = dma.hbm_to_vmem [thread:$0]  %s0, 128, %s23, [#allocation3]
    $region5: #{tpu_custom_call.1} parent=1 // pred_fallthru
      _
    // Predicated region
    $region6: #{tpu_custom_call.1} parent=1 // pred_check
      _
    $region7: #{tpu_custom_call.1} parent=1 // pred_check_branch
      %27 = sbr.rel (0) target = $region9
    $region8: #{tpu_custom_call.1} parent=1 // pred_region
      %s29 = ssub.s32 4096, 4096
      %30 = vsyncadd [#allocation6], %s29
      %s31 = sshll.u32 [#allocation5], 4
      %s32 = int_to_ptr.vmem [resolvable:$true] %s31
      %37 = dma.hbm_to_vmem [thread:$0]  %s1, 4096, %s32, [#allocation6], 128, 128, 8
    $region9: #{tpu_custom_call.1} parent=1 // pred_fallthru
      _
    // Predicated region
    $region10: #{tpu_custom_call.1} parent=1 // pred_check
      _
    $region11: #{tpu_custom_call.1} parent=1 // pred_check_branch
      %39 = sbr.rel (0) target = $region13
    $region12: #{tpu_custom_call.1} parent=1 // pred_region
      _
    $region13: #{tpu_custom_call.1} parent=1 // pred_fallthru
      _
    // Predicated region
    $region14: #{tpu_custom_call.1} parent=1 // pred_check
      _
    $region15: #{tpu_custom_call.1} parent=1 // pred_check_branch
      %41 = sbr.rel (0) target = $region17
    $region16: #{tpu_custom_call.1} parent=1 // pred_region
      %s43 = ssub.s32 2048, 2048
      %44 = vsyncadd [#allocation6], %s43
      %s45 = sshll.u32 [#allocation7], 4
      %s46 = int_to_ptr.vmem [resolvable:$true] %s45
      %51 = dma.hbm_to_vmem [thread:$0]  %s3, 2048, %s46, [#allocation6], 64, 64, 4
    $region17: #{tpu_custom_call.1} parent=1 // pred_fallthru
      _
    // Predicated region
    $region18: #{tpu_custom_call.1} parent=1 // pred_check
      _
    $region19: #{tpu_custom_call.1} parent=1 // pred_check_branch
      %53 = sbr.rel (0) target = $region21
    $region20: #{tpu_custom_call.1} parent=1 // pred_region
      _
    $region21: #{tpu_custom_call.1} parent=1 // pred_fallthru
      _
    // Predicated region
    $region22: #{tpu_custom_call.1} parent=1 // pred_check
      _
    $region23: #{tpu_custom_call.1} parent=1 // pred_check_branch
      %55 = sbr.rel (0) target = $region25
    $region24: #{tpu_custom_call.1} parent=1 // pred_region
      %s57 = ssub.s32 1024, 1024
      %58 = vsyncadd [#allocation9], %s57
      %s59 = sshll.u32 [#allocation8], 4
      %s60 = int_to_ptr.vmem [resolvable:$true] %s59
      %65 = dma.hbm_to_vmem [thread:$0]  %s5, 1024, %s60, [#allocation9], 64, 64, 4
    $region25: #{tpu_custom_call.1} parent=1 // pred_fallthru
      _
    // Predicated region
    $region26: #{tpu_custom_call.1} parent=1 // pred_check
      _
    $region27: #{tpu_custom_call.1} parent=1 // pred_check_branch
      %67 = sbr.rel (0) target = $region29
    $region28: #{tpu_custom_call.1} parent=1 // pred_region
      _
    $region29: #{tpu_custom_call.1} parent=1 // pred_fallthru
      _
    // Predicated region
    $region30: #{tpu_custom_call.1} parent=1 // pred_check
      _
    $region31: #{tpu_custom_call.1} parent=1 // pred_check_branch
      %69 = sbr.rel (0) target = $region33
    $region32: #{tpu_custom_call.1} parent=1 // pred_region
      %70 = dma.done [#allocation3], 128
    $region33: #{tpu_custom_call.1} parent=1 // pred_fallthru
      _
    // Predicated region
    $region34: #{tpu_custom_call.1} parent=1 // pred_check
      _
    $region35: #{tpu_custom_call.1} parent=1 // pred_check_branch
      %72 = sbr.rel (0) target = $region37
    $region36: #{tpu_custom_call.1} parent=1 // pred_region
      %73 = dma.done [#allocation6], 4096
    $region37: #{tpu_custom_call.1} parent=1 // pred_fallthru
      _
    // Predicated region
    $region38: #{tpu_custom_call.1} parent=1 // pred_check
      _
    $region39: #{tpu_custom_call.1} parent=1 // pred_check_branch
      %75 = sbr.rel (0) target = $region41
    $region40: #{tpu_custom_call.1} parent=1 // pred_region
      %76 = dma.done [#allocation6], 2048
    $region41: #{tpu_custom_call.1} parent=1 // pred_fallthru
      _
    // Predicated region
    $region42: #{tpu_custom_call.1} parent=1 // pred_check
      _
    $region43: #{tpu_custom_call.1} parent=1 // pred_check_branch
      %78 = sbr.rel (0) target = $region45
    $region44: #{tpu_custom_call.1} parent=1 // pred_region
      %79 = dma.done [#allocation9], 1024
    $region45: #{tpu_custom_call.1} parent=1 // pred_fallthru
      _
    %v81 = vld [vmem:[#allocation2] sm:$0xff]
    %v82 = vld [vmem:[#allocation5] sm:$0xff]
    %v83 = vld [vmem:[#allocation5 + $0x8] sm:$0xff]
    %v84 = vld [vmem:[#allocation5 + $0x10] sm:$0xff]
    %v85 = vld [vmem:[#allocation5 + $0x18] sm:$0xff]
    %v86 = vld [vmem:[#allocation5 + $0x20] sm:$0xff]
    %v87 = vld [vmem:[#allocation5 + $0x28] sm:$0xff]
    %v88 = vld [vmem:[#allocation5 + $0x30] sm:$0xff]
    %v89 = vld [vmem:[#allocation5 + $0x38] sm:$0xff]
    %v90 = vld [vmem:[#allocation5 + $0x40] sm:$0xff]
    %v91 = vld [vmem:[#allocation5 + $0x48] sm:$0xff]
    %v92 = vld [vmem:[#allocation5 + $0x50] sm:$0xff]
    %v93 = vld [vmem:[#allocation5 + $0x58] sm:$0xff]
    %v94 = vld [vmem:[#allocation5 + $0x60] sm:$0xff]
    %v95 = vld [vmem:[#allocation5 + $0x68] sm:$0xff]
    %v96 = vld [vmem:[#allocation5 + $0x70] sm:$0xff]
    %v97 = vld [vmem:[#allocation5 + $0x78] sm:$0xff]
    %v98 = vld [vmem:[#allocation5 + $0x80] sm:$0xff]
    %v99 = vld [vmem:[#allocation5 + $0x88] sm:$0xff]
    %v100 = vld [vmem:[#allocation5 + $0x90] sm:$0xff]
    %v101 = vld [vmem:[#allocation5 + $0x98] sm:$0xff]
    %v102 = vld [vmem:[#allocation5 + $0xa0] sm:$0xff]
    %v103 = vld [vmem:[#allocation5 + $0xa8] sm:$0xff]
    %v104 = vld [vmem:[#allocation5 + $0xb0] sm:$0xff]
    %v105 = vld [vmem:[#allocation5 + $0xb8] sm:$0xff]
    %v106 = vld [vmem:[#allocation5 + $0xc0] sm:$0xff]
    %v107 = vld [vmem:[#allocation5 + $0xc8] sm:$0xff]
    %v108 = vld [vmem:[#allocation5 + $0xd0] sm:$0xff]
    %v109 = vld [vmem:[#allocation5 + $0xd8] sm:$0xff]
    %v110 = vld [vmem:[#allocation5 + $0xe0] sm:$0xff]
    %v111 = vld [vmem:[#allocation5 + $0xe8] sm:$0xff]
    %v112 = vld [vmem:[#allocation5 + $0xf0] sm:$0xff]
    %v113 = vld [vmem:[#allocation5 + $0xf8] sm:$0xff]
    %v114 = vld [vmem:[%s2] sm:$0x3]
    %v116 = vlaneseq
    %v117 = vshrl.u32 %v116, 7
    %v118 = vsub.s32 0, %v117
    %v119 = vrot.slane %v114, %v118
    %v120 = vlaneseq
    %v121 = vshrl.u32 %v120, 7
    %v122 = vsub.s32 1, %v121
    %v123 = vrot.slane %v114, %v122
    %v127 = vunpack.c.l.b16 %v81
    %v128 = vunpack.c.h.b16 %v81
    %v129 = vpack.c.b16 %v127, %v127
    %v130 = vpack.c.b16 %v128, %v128
    %v165 = vunpack.c.l.b16 %v82
    %v166 = vunpack.c.h.b16 %v82
    %v167 = vunpack.c.l.b16 %v83
    %v168 = vunpack.c.h.b16 %v83
    %v169 = vunpack.c.l.b16 %v84
    %v170 = vunpack.c.h.b16 %v84
    %v171 = vunpack.c.l.b16 %v85
    %v172 = vunpack.c.h.b16 %v85
    %v173 = vunpack.c.l.b16 %v86
    %v174 = vunpack.c.h.b16 %v86
    %v175 = vunpack.c.l.b16 %v87
    %v176 = vunpack.c.h.b16 %v87
    %v177 = vunpack.c.l.b16 %v88
    %v178 = vunpack.c.h.b16 %v88
    %v179 = vunpack.c.l.b16 %v89
    %v180 = vunpack.c.h.b16 %v89
    %v181 = vunpack.c.l.b16 %v90
    %v182 = vunpack.c.h.b16 %v90
    %v183 = vunpack.c.l.b16 %v91
    %v184 = vunpack.c.h.b16 %v91
    %v185 = vunpack.c.l.b16 %v92
    %v186 = vunpack.c.h.b16 %v92
    %v187 = vunpack.c.l.b16 %v93
    %v188 = vunpack.c.h.b16 %v93
    %v189 = vunpack.c.l.b16 %v94
    %v190 = vunpack.c.h.b16 %v94
    %v191 = vunpack.c.l.b16 %v95
    %v192 = vunpack.c.h.b16 %v95
    %v193 = vunpack.c.l.b16 %v96
    %v194 = vunpack.c.h.b16 %v96
    %v195 = vunpack.c.l.b16 %v97
    %v196 = vunpack.c.h.b16 %v97
    %v197 = vunpack.c.l.b16 %v98
    %v198 = vunpack.c.h.b16 %v98
    %v199 = vunpack.c.l.b16 %v99
    %v200 = vunpack.c.h.b16 %v99
    %v201 = vunpack.c.l.b16 %v100
    %v202 = vunpack.c.h.b16 %v100
    %v203 = vunpack.c.l.b16 %v101
    %v204 = vunpack.c.h.b16 %v101
    %v205 = vunpack.c.l.b16 %v102
    %v206 = vunpack.c.h.b16 %v102
    %v207 = vunpack.c.l.b16 %v103
    %v208 = vunpack.c.h.b16 %v103
    %v209 = vunpack.c.l.b16 %v104
    %v210 = vunpack.c.h.b16 %v104
    %v211 = vunpack.c.l.b16 %v105
    %v212 = vunpack.c.h.b16 %v105
    %v213 = vunpack.c.l.b16 %v106
    %v214 = vunpack.c.h.b16 %v106
    %v215 = vunpack.c.l.b16 %v107
    %v216 = vunpack.c.h.b16 %v107
    %v217 = vunpack.c.l.b16 %v108
    %v218 = vunpack.c.h.b16 %v108
    %v219 = vunpack.c.l.b16 %v109
    %v220 = vunpack.c.h.b16 %v109
    %v221 = vunpack.c.l.b16 %v110
    %v222 = vunpack.c.h.b16 %v110
    %v223 = vunpack.c.l.b16 %v111
    %v224 = vunpack.c.h.b16 %v111
    %v225 = vunpack.c.l.b16 %v112
    %v226 = vunpack.c.h.b16 %v112
    %v227 = vunpack.c.l.b16 %v113
    %v228 = vunpack.c.h.b16 %v113
    %v229 = vpack.c.b16 %v167, %v165
    %v230 = vpack.c.b16 %v168, %v166
    %v231 = vpack.c.b16 %v171, %v169
    %v232 = vpack.c.b16 %v172, %v170
    %v233 = vpack.c.b16 %v175, %v173
    %v234 = vpack.c.b16 %v176, %v174
    %v235 = vpack.c.b16 %v179, %v177
    %v236 = vpack.c.b16 %v180, %v178
    %v237 = vpack.c.b16 %v183, %v181
    %v238 = vpack.c.b16 %v184, %v182
    %v239 = vpack.c.b16 %v187, %v185
    %v240 = vpack.c.b16 %v188, %v186
    %v241 = vpack.c.b16 %v191, %v189
    %v242 = vpack.c.b16 %v192, %v190
    %v243 = vpack.c.b16 %v195, %v193
    %v244 = vpack.c.b16 %v196, %v194
    %v245 = vpack.c.b16 %v199, %v197
    %v246 = vpack.c.b16 %v200, %v198
    %v247 = vpack.c.b16 %v203, %v201
    %v248 = vpack.c.b16 %v204, %v202
    %v249 = vpack.c.b16 %v207, %v205
    %v250 = vpack.c.b16 %v208, %v206
    %v251 = vpack.c.b16 %v211, %v209
    %v252 = vpack.c.b16 %v212, %v210
    %v253 = vpack.c.b16 %v215, %v213
    %v254 = vpack.c.b16 %v216, %v214
    %v255 = vpack.c.b16 %v219, %v217
    %v256 = vpack.c.b16 %v220, %v218
    %v257 = vpack.c.b16 %v223, %v221
    %v258 = vpack.c.b16 %v224, %v222
    %v259 = vpack.c.b16 %v227, %v225
    %v260 = vpack.c.b16 %v228, %v226
    %293 = vmatprep.subr.bf16.mxu0 %v230
    %294 = vmatpush1.bf16.msra.mxu0 %v229
    %295 = vmatprep.subr.bf16.mxu0 %v232
    %296 = vmatpush1.bf16.msra.mxu0 %v231
    %297 = vmatprep.subr.bf16.mxu0 %v234
    %298 = vmatpush1.bf16.msra.mxu0 %v233
    %299 = vmatprep.subr.bf16.mxu0 %v236
    %300 = vmatpush1.bf16.msra.mxu0 %v235
    %301 = vmatprep.subr.bf16.mxu0 %v238
    %302 = vmatpush1.bf16.msra.mxu0 %v237
    %303 = vmatprep.subr.bf16.mxu0 %v240
    %304 = vmatpush1.bf16.msra.mxu0 %v239
    %305 = vmatprep.subr.bf16.mxu0 %v242
    %306 = vmatpush1.bf16.msra.mxu0 %v241
    %307 = vmatprep.subr.bf16.mxu0 %v244
    %308 = vmatpush1.bf16.msra.mxu0 %v243
    %309 = vmatprep.subr.bf16.mxu0 %v246
    %310 = vmatpush1.bf16.msra.mxu0 %v245
    %311 = vmatprep.subr.bf16.mxu0 %v248
    %312 = vmatpush1.bf16.msra.mxu0 %v247
    %313 = vmatprep.subr.bf16.mxu0 %v250
    %314 = vmatpush1.bf16.msra.mxu0 %v249
    %315 = vmatprep.subr.bf16.mxu0 %v252
    %316 = vmatpush1.bf16.msra.mxu0 %v251
    %317 = vmatprep.subr.bf16.mxu0 %v254
    %318 = vmatpush1.bf16.msra.mxu0 %v253
    %319 = vmatprep.subr.bf16.mxu0 %v256
    %320 = vmatpush1.bf16.msra.mxu0 %v255
    %321 = vmatprep.subr.bf16.mxu0 %v258
    %322 = vmatpush1.bf16.msra.mxu0 %v257
    %323 = vmatprep.subr.bf16.mxu0 %v260
    %324 = vmatpush1.bf16.msra.mxu0 %v259
    %325 = vmatprep.mubr.bf16.mxu0 %v130
    %326 = vmatmul.mubr.bf16.gmra.mrb[0].mxu0 %v129
    %v327 = vpop.f32.mrb[0].mxu0
    %v328 = vadd.f32 %v119, %v327
    %v329 = vpop.f32.mrb[0].mxu0
    %v330 = vadd.f32 %v123, %v329
    %v331 = vpop.f32.mrb[0].mxu0
    %v332 = vpop.f32.mrb[0].mxu0
    %333 = vdwg.mxu0
    %v334 = vmax.f32 %v328, 0.0
    %v335 = vmax.f32 %v330, 0.0
    %v336 = vpack.c.bf16 %v334, %v334
    %v337 = vpack.c.bf16 %v335, %v335
    %v338 = vld [vmem:[#allocation7] sm:$0xf]
    %v339 = vld [vmem:[#allocation7 + $0x4] sm:$0xf]
    %v340 = vld [vmem:[#allocation7 + $0x8] sm:$0xf]
    %v341 = vld [vmem:[#allocation7 + $0xc] sm:$0xf]
    %v342 = vld [vmem:[#allocation7 + $0x10] sm:$0xf]
    %v343 = vld [vmem:[#allocation7 + $0x14] sm:$0xf]
    %v344 = vld [vmem:[#allocation7 + $0x18] sm:$0xf]
    %v345 = vld [vmem:[#allocation7 + $0x1c] sm:$0xf]
    %v346 = vld [vmem:[#allocation7 + $0x20] sm:$0xf]
    %v347 = vld [vmem:[#allocation7 + $0x24] sm:$0xf]
    %v348 = vld [vmem:[#allocation7 + $0x28] sm:$0xf]
    %v349 = vld [vmem:[#allocation7 + $0x2c] sm:$0xf]
    %v350 = vld [vmem:[#allocation7 + $0x30] sm:$0xf]
    %v351 = vld [vmem:[#allocation7 + $0x34] sm:$0xf]
    %v352 = vld [vmem:[#allocation7 + $0x38] sm:$0xf]
    %v353 = vld [vmem:[#allocation7 + $0x3c] sm:$0xf]
    %v354 = vld [vmem:[#allocation7 + $0x40] sm:$0xf]
    %v355 = vld [vmem:[#allocation7 + $0x44] sm:$0xf]
    %v356 = vld [vmem:[#allocation7 + $0x48] sm:$0xf]
    %v357 = vld [vmem:[#allocation7 + $0x4c] sm:$0xf]
    %v358 = vld [vmem:[#allocation7 + $0x50] sm:$0xf]
    %v359 = vld [vmem:[#allocation7 + $0x54] sm:$0xf]
    %v360 = vld [vmem:[#allocation7 + $0x58] sm:$0xf]
    %v361 = vld [vmem:[#allocation7 + $0x5c] sm:$0xf]
    %v362 = vld [vmem:[#allocation7 + $0x60] sm:$0xf]
    %v363 = vld [vmem:[#allocation7 + $0x64] sm:$0xf]
    %v364 = vld [vmem:[#allocation7 + $0x68] sm:$0xf]
    %v365 = vld [vmem:[#allocation7 + $0x6c] sm:$0xf]
    %v366 = vld [vmem:[#allocation7 + $0x70] sm:$0xf]
    %v367 = vld [vmem:[#allocation7 + $0x74] sm:$0xf]
    %v368 = vld [vmem:[#allocation7 + $0x78] sm:$0xf]
    %v369 = vld [vmem:[#allocation7 + $0x7c] sm:$0xf]
    %v370 = vld [vmem:[%s4] sm:$0x1]
    %v372 = vlaneseq
    %v373 = vshrl.u32 %v372, 7
    %v374 = vsub.s32 0, %v373
    %v375 = vrot.slane %v370, %v374
    %v409 = vunpack.c.l.b16 %v338
    %v410 = vunpack.c.l.b16 %v339
    %v411 = vunpack.c.l.b16 %v340
    %v412 = vunpack.c.l.b16 %v341
    %v413 = vunpack.c.l.b16 %v342
    %v414 = vunpack.c.l.b16 %v343
    %v415 = vunpack.c.l.b16 %v344
    %v416 = vunpack.c.l.b16 %v345
    %v417 = vunpack.c.l.b16 %v346
    %v418 = vunpack.c.l.b16 %v347
    %v419 = vunpack.c.l.b16 %v348
    %v420 = vunpack.c.l.b16 %v349
    %v421 = vunpack.c.l.b16 %v350
    %v422 = vunpack.c.l.b16 %v351
    %v423 = vunpack.c.l.b16 %v352
    %v424 = vunpack.c.l.b16 %v353
    %v425 = vunpack.c.l.b16 %v354
    %v426 = vunpack.c.l.b16 %v355
    %v427 = vunpack.c.l.b16 %v356
    %v428 = vunpack.c.l.b16 %v357
    %v429 = vunpack.c.l.b16 %v358
    %v430 = vunpack.c.l.b16 %v359
    %v431 = vunpack.c.l.b16 %v360
    %v432 = vunpack.c.l.b16 %v361
    %v433 = vunpack.c.l.b16 %v362
    %v434 = vunpack.c.l.b16 %v363
    %v435 = vunpack.c.l.b16 %v364
    %v436 = vunpack.c.l.b16 %v365
    %v437 = vunpack.c.l.b16 %v366
    %v438 = vunpack.c.l.b16 %v367
    %v439 = vunpack.c.l.b16 %v368
    %v440 = vunpack.c.l.b16 %v369
    %v441 = vpack.c.b16 %v410, %v409
    %v442 = vpack.c.b16 %v412, %v411
    %v443 = vpack.c.b16 %v414, %v413
    %v444 = vpack.c.b16 %v416, %v415
    %v445 = vpack.c.b16 %v418, %v417
    %v446 = vpack.c.b16 %v420, %v419
    %v447 = vpack.c.b16 %v422, %v421
    %v448 = vpack.c.b16 %v424, %v423
    %v449 = vpack.c.b16 %v426, %v425
    %v450 = vpack.c.b16 %v428, %v427
    %v451 = vpack.c.b16 %v430, %v429
    %v452 = vpack.c.b16 %v432, %v431
    %v453 = vpack.c.b16 %v434, %v433
    %v454 = vpack.c.b16 %v436, %v435
    %v455 = vpack.c.b16 %v438, %v437
    %v456 = vpack.c.b16 %v440, %v439
    %473 = vmatprep.subr.bf16.mxu0 0
    %474 = vmatpush1.bf16.msra.mxu0 %v441
    %475 = vmatprep.subr.bf16.mxu0 0
    %476 = vmatpush1.bf16.msra.mxu0 %v442
    %477 = vmatprep.subr.bf16.mxu0 0
    %478 = vmatpush1.bf16.msra.mxu0 %v443
    %479 = vmatprep.subr.bf16.mxu0 0
    %480 = vmatpush1.bf16.msra.mxu0 %v444
    %481 = vmatprep.subr.bf16.mxu0 0
    %482 = vmatpush1.bf16.msra.mxu0 %v445
    %483 = vmatprep.subr.bf16.mxu0 0
    %484 = vmatpush1.bf16.msra.mxu0 %v446
    %485 = vmatprep.subr.bf16.mxu0 0
    %486 = vmatpush1.bf16.msra.mxu0 %v447
    %487 = vmatprep.subr.bf16.mxu0 0
    %488 = vmatpush1.bf16.msra.mxu0 %v448
    %489 = vmatprep.subr.bf16.mxu0 0
    %490 = vmatpush1.bf16.msra.mxu0 %v449
    %491 = vmatprep.subr.bf16.mxu0 0
    %492 = vmatpush1.bf16.msra.mxu0 %v450
    %493 = vmatprep.subr.bf16.mxu0 0
    %494 = vmatpush1.bf16.msra.mxu0 %v451
    %495 = vmatprep.subr.bf16.mxu0 0
    %496 = vmatpush1.bf16.msra.mxu0 %v452
    %497 = vmatprep.subr.bf16.mxu0 0
    %498 = vmatpush1.bf16.msra.mxu0 %v453
    %499 = vmatprep.subr.bf16.mxu0 0
    %500 = vmatpush1.bf16.msra.mxu0 %v454
    %501 = vmatprep.subr.bf16.mxu0 0
    %502 = vmatpush1.bf16.msra.mxu0 %v455
    %503 = vmatprep.subr.bf16.mxu0 0
    %504 = vmatpush1.bf16.msra.mxu0 %v456
    %505 = vmatprep.mubr.bf16.mxu0 %v337
    %506 = vmatmul.mubr.bf16.gmra.mrb[0].mxu0 %v336
    %v507 = vpop.f32.mrb[0].mxu0
    %v508 = vadd.f32 %v375, %v507
    %v509 = vpop.f32.mrb[0].mxu0
    %v510 = vpop.f32.mrb[0].mxu0
    %v511 = vpop.f32.mrb[0].mxu0
    %512 = vdwg.mxu0
    %v513 = vmax.f32 %v508, 0.0
    %v514 = vpack.c.bf16 %v513, %v513
    %v515 = vld [vmem:[#allocation8] sm:$0xf]
    %v516 = vld [vmem:[#allocation8 + $0x4] sm:$0xf]
    %v517 = vld [vmem:[#allocation8 + $0x8] sm:$0xf]
    %v518 = vld [vmem:[#allocation8 + $0xc] sm:$0xf]
    %v519 = vld [vmem:[#allocation8 + $0x10] sm:$0xf]
    %v520 = vld [vmem:[#allocation8 + $0x14] sm:$0xf]
    %v521 = vld [vmem:[#allocation8 + $0x18] sm:$0xf]
    %v522 = vld [vmem:[#allocation8 + $0x1c] sm:$0xf]
    %v523 = vld [vmem:[#allocation8 + $0x20] sm:$0xf]
    %v524 = vld [vmem:[#allocation8 + $0x24] sm:$0xf]
    %v525 = vld [vmem:[#allocation8 + $0x28] sm:$0xf]
    %v526 = vld [vmem:[#allocation8 + $0x2c] sm:$0xf]
    %v527 = vld [vmem:[#allocation8 + $0x30] sm:$0xf]
    %v528 = vld [vmem:[#allocation8 + $0x34] sm:$0xf]
    %v529 = vld [vmem:[#allocation8 + $0x38] sm:$0xf]
    %v530 = vld [vmem:[#allocation8 + $0x3c] sm:$0xf]
    %v531 = vld [vmem:[%s6] sm:$0x1]
    %v533 = vlaneseq
    %v534 = vshrl.u32 %v533, 7
    %v535 = vsub.s32 0, %v534
    %v536 = vrot.slane %v531, %v535
    %v554 = vunpack.c.l.b16 %v515
    %v555 = vunpack.c.l.b16 %v516
    %v556 = vunpack.c.l.b16 %v517
    %v557 = vunpack.c.l.b16 %v518
    %v558 = vunpack.c.l.b16 %v519
    %v559 = vunpack.c.l.b16 %v520
    %v560 = vunpack.c.l.b16 %v521
    %v561 = vunpack.c.l.b16 %v522
    %v562 = vunpack.c.l.b16 %v523
    %v563 = vunpack.c.l.b16 %v524
    %v564 = vunpack.c.l.b16 %v525
    %v565 = vunpack.c.l.b16 %v526
    %v566 = vunpack.c.l.b16 %v527
    %v567 = vunpack.c.l.b16 %v528
    %v568 = vunpack.c.l.b16 %v529
    %v569 = vunpack.c.l.b16 %v530
    %v570 = vpack.c.b16 %v555, %v554
    %v571 = vpack.c.b16 %v557, %v556
    %v572 = vpack.c.b16 %v559, %v558
    %v573 = vpack.c.b16 %v561, %v560
    %v574 = vpack.c.b16 %v563, %v562
    %v575 = vpack.c.b16 %v565, %v564
    %v576 = vpack.c.b16 %v567, %v566
    %v577 = vpack.c.b16 %v569, %v568
    %586 = vmatprep.subr.bf16.mxu0 0
    %587 = vmatpush1.bf16.msra.mxu0 %v570
    %588 = vmatprep.subr.bf16.mxu0 0
    %589 = vmatpush1.bf16.msra.mxu0 %v571
    %590 = vmatprep.subr.bf16.mxu0 0
    %591 = vmatpush1.bf16.msra.mxu0 %v572
    %592 = vmatprep.subr.bf16.mxu0 0
    %593 = vmatpush1.bf16.msra.mxu0 %v573
    %594 = vmatprep.subr.bf16.mxu0 0
    %595 = vmatpush1.bf16.msra.mxu0 %v574
    %596 = vmatprep.subr.bf16.mxu0 0
    %597 = vmatpush1.bf16.msra.mxu0 %v575
    %598 = vmatprep.subr.bf16.mxu0 0
    %599 = vmatpush1.bf16.msra.mxu0 %v576
    %600 = vmatprep.subr.bf16.mxu0 0
    %601 = vmatpush1.bf16.msra.mxu0 %v577
    %602 = vmatprep.subr.bf16.mxu0 0
    %603 = vmatpush1.bf16.msra.mxu0 0
    %604 = vmatprep.subr.bf16.mxu0 0
    %605 = vmatpush1.bf16.msra.mxu0 0
    %606 = vmatprep.subr.bf16.mxu0 0
    %607 = vmatpush1.bf16.msra.mxu0 0
    %608 = vmatprep.subr.bf16.mxu0 0
    %609 = vmatpush1.bf16.msra.mxu0 0
    %610 = vmatprep.subr.bf16.mxu0 0
    %611 = vmatpush1.bf16.msra.mxu0 0
    %612 = vmatprep.subr.bf16.mxu0 0
    %613 = vmatpush1.bf16.msra.mxu0 0
    %614 = vmatprep.subr.bf16.mxu0 0
    %615 = vmatpush1.bf16.msra.mxu0 0
    %616 = vmatprep.subr.bf16.mxu0 0
    %617 = vmatpush1.bf16.msra.mxu0 0
    %618 = vmatprep.mubr.bf16.mxu0 0
    %619 = vmatmul.mubr.bf16.gmra.mrb[0].mxu0 %v514
    %v620 = vpop.f32.mrb[0].mxu0
    %v621 = vadd.f32 %v536, %v620
    %v622 = vpop.f32.mrb[0].mxu0
    %v623 = vpop.f32.mrb[0].mxu0
    %v624 = vpop.f32.mrb[0].mxu0
    %625 = vdwg.mxu0
    %626 = vst [vmem:[#allocation10] sm:$0xff] %v621
    // Predicated region
    $region46: #{tpu_custom_call.1} parent=1 // pred_check
      _
    $region47: #{tpu_custom_call.1} parent=1 // pred_check_branch
      %628 = sbr.rel (0) target = $region49
    $region48: #{tpu_custom_call.1} parent=1 // pred_region
      %s630 = ssub.s32 128, 128
      %631 = vsyncadd [#allocation4], %s630
      %s633 = sshll.u32 [#allocation10], 4
      %s634 = int_to_ptr.vmem [resolvable:$true] %s633
      %636 = dma.vmem_to_hbm [thread:$0]  %s634, 128, %s7, [#allocation4]
    $region49: #{tpu_custom_call.1} parent=1 // pred_fallthru
      _
    // Predicated region
    $region50: #{tpu_custom_call.1} parent=1 // pred_check
      _
    $region51: #{tpu_custom_call.1} parent=1 // pred_check_branch
      %638 = sbr.rel (0) target = $region53
    $region52: #{tpu_custom_call.1} parent=1 // pred_region
      %639 = dma.done [#allocation4], 128
    $region53: #{tpu_custom_call.1} parent=1 // pred_fallthru
      _
    %640 = vsyncpa [#allocation3], 1
    %641 = vsyncpa [#allocation6], 1
    %642 = vsyncpa [#allocation9], 1
    %643 = vsyncpa [#allocation4], 1

</llo_original>
